<compile_context>
chip_gen: v5e
topology: v5e:2x2
jax: 0.10.0
libtpu: 0.0.40
codegen_flags: <defaults>
</compile_context>

<pallas_src>
import functools

import jax
import jax.numpy as jnp
from jax.experimental import pallas as pl
from jax.experimental.pallas import tpu as pltpu

LANE = 128


def _round_up(n, m):
    return ((n + m - 1) // m) * m


def _mlp_kernel(x_ref,
                w1_ref, b1_ref,
                w2_ref, b2_ref,
                w3_ref, b3_ref,
                w4_ref, b4_ref,
                o_ref):
    """Fused 4-layer MLP on one batch tile: bf16 matmuls, f32 accum/epilogue."""
    x = x_ref[...].astype(jnp.bfloat16)

    h = jnp.dot(x, w1_ref[...], preferred_element_type=jnp.float32)
    h = jnp.maximum(h + b1_ref[...], 0.0)

    h = jnp.dot(h.astype(jnp.bfloat16), w2_ref[...],
                preferred_element_type=jnp.float32)
    h = jnp.maximum(h + b2_ref[...], 0.0)

    h = jnp.dot(h.astype(jnp.bfloat16), w3_ref[...],
                preferred_element_type=jnp.float32)
    h = jnp.maximum(h + b3_ref[...], 0.0)

    h = jnp.dot(h.astype(jnp.bfloat16), w4_ref[...],
                preferred_element_type=jnp.float32)
    o_ref[...] = (h + b4_ref[...]).astype(o_ref.dtype)
    # TODO(synk): if a bundle dump ever shows vld/vst slot saturation at very
    # large tile_b (inter-layer activation spills), sub-tile the batch block
    # with an unrolled lax.fori_loop; not needed at these feature widths.


@functools.partial(jax.jit, static_argnames=("output_dim", "tile_b"))
def vanilla_mlp_forward(x, params, *, output_dim=None, tile_b=256):
    """params = ((W1,b1),...,(W4,b4)); Wi is bf16 [fan_in_pad, fan_out_pad]
    (pre-transposed vs torch so the kernel does x @ W + b), bi is f32
    [1, fan_out_pad].  Returns f32 [B, output_dim] (or the full padded width
    if output_dim is None)."""
    B, D_in = x.shape
    D_out_pad = params[-1][0].shape[1]

    # Keep the batch tile a multiple of 8 and no larger than needed.
    tile_b = min(tile_b, _round_up(B, 8))

    grid = (pl.cdiv(B, tile_b),)

    in_specs = [pl.BlockSpec((tile_b, D_in), lambda i: (i, 0))]
    flat_params = []
    for (w, b) in params:
        # Grid-invariant blocks: single-buffer them (no double-buffer needed).
        in_specs.append(pl.BlockSpec(w.shape, lambda i: (0, 0),
                                     pipeline_mode=pl.Buffered(1)))
        in_specs.append(pl.BlockSpec(b.shape, lambda i: (0, 0),
                                     pipeline_mode=pl.Buffered(1)))
        flat_params.extend([w, b])

    out_specs = pl.BlockSpec((tile_b, D_out_pad), lambda i: (i, 0))

    out = pl.pallas_call(
        _mlp_kernel,
        out_shape=jax.ShapeDtypeStruct((B, D_out_pad), jnp.float32),
        grid=grid,
        in_specs=in_specs,
        out_specs=out_specs,
        compiler_params=pltpu.CompilerParams(
            dimension_semantics=("parallel",)),
    )(x, *flat_params)

    if output_dim is None:
        return out
    return out[:, :output_dim]


def init_vanilla_mlp_params(key, input_dim, output_dim,
                            hidden_dims=(100, 50, 25),
                            param_dtype=jnp.bfloat16):
    """Xavier-normal weights, zero biases (matches initialize_parameters()).
    Weights are pre-transposed to [fan_in, fan_out] and zero-padded so every
    fan_out (and the downstream fan_in) is a multiple of 128; the zero padding
    is inert through matmul/ReLU, so semantics match the unpadded MLP."""
    dims = (input_dim,) + tuple(hidden_dims) + (output_dim,)
    params = []
    fan_in_pad = input_dim          # x itself stays unpadded
    for fan_in, fan_out in zip(dims[:-1], dims[1:]):
        key, sub = jax.random.split(key)
        std = (2.0 / (fan_in + fan_out)) ** 0.5
        w = std * jax.random.normal(sub, (fan_in, fan_out), dtype=jnp.float32)
        fan_out_pad = _round_up(fan_out, LANE)
        w_pad = jnp.zeros((fan_in_pad, fan_out_pad), jnp.float32)
        w_pad = w_pad.at[:fan_in, :fan_out].set(w)
        params.append((w_pad.astype(param_dtype),
                       jnp.zeros((1, fan_out_pad), jnp.float32)))
        fan_in_pad = fan_out_pad
    return tuple(params)


def _ref_forward(x, params, output_dim):
    """Pure-JAX reference mirroring the kernel numerics (bf16 ops, f32 acc)."""
    h = x
    n = len(params)
    for i, (w, b) in enumerate(params):
        h = jnp.dot(h.astype(jnp.bfloat16), w,
                    preferred_element_type=jnp.float32) + b
        if i < n - 1:
            h = jnp.maximum(h, 0.0)
    return h[:, :output_dim]


if __name__ == "__main__":
    key = jax.random.PRNGKey(0)
    k_x, k_p = jax.random.split(key)

    batch, input_dim, output_dim = 256, 32, 16
    hidden_dims = (100, 50, 25)
    tile_b = 128    # -> 2 grid steps so both v7x TensorCores get a tile

    x = jax.random.normal(k_x, (batch, input_dim), dtype=jnp.float32)
    params = init_vanilla_mlp_params(k_p, input_dim, output_dim, hidden_dims)

    out = vanilla_mlp_forward(x, params, output_dim=output_dim, tile_b=tile_b)
    out = jax.block_until_ready(out)

    ref = _ref_forward(x, params, output_dim)
    assert out.shape == (batch, output_dim), out.shape
    assert jnp.allclose(out, ref, atol=1e-2, rtol=1e-2), \
        float(jnp.max(jnp.abs(out - ref)))

    print("KERNEL_OK")
</pallas_src>

<mosaic_0001>
module attributes {stable_mosaic.version = 11 : i64} {
  func.func @_mlp_kernel(%arg0: i32, %arg1: memref<128x32xf32, #tpu.memory_space<vmem>>, %arg2: memref<32x128xbf16, #tpu.memory_space<vmem>>, %arg3: memref<1x128xf32, #tpu.memory_space<vmem>>, %arg4: memref<128x128xbf16, #tpu.memory_space<vmem>>, %arg5: memref<1x128xf32, #tpu.memory_space<vmem>>, %arg6: memref<128x128xbf16, #tpu.memory_space<vmem>>, %arg7: memref<1x128xf32, #tpu.memory_space<vmem>>, %arg8: memref<128x128xbf16, #tpu.memory_space<vmem>>, %arg9: memref<1x128xf32, #tpu.memory_space<vmem>>, %arg10: memref<128x128xf32, #tpu.memory_space<vmem>>) attributes {dimension_semantics = [#tpu.dimension_semantics<parallel>], iteration_bounds = array<i64: 2>, scalar_prefetch = 0 : i64, scratch_operands = 0 : i64, tpu.core_type = #tpu.core_type<tc>, window_params = [{transform_indices = @transform_0, window_bounds = array<i64: 128, 32>}, {pipeline_mode = #tpu.pipeline_mode<synchronous>, transform_indices = @transform_1, window_bounds = array<i64: 32, 128>}, {pipeline_mode = #tpu.pipeline_mode<synchronous>, transform_indices = @transform_2, window_bounds = array<i64: 1, 128>}, {pipeline_mode = #tpu.pipeline_mode<synchronous>, transform_indices = @transform_3, window_bounds = array<i64: 128, 128>}, {pipeline_mode = #tpu.pipeline_mode<synchronous>, transform_indices = @transform_4, window_bounds = array<i64: 1, 128>}, {pipeline_mode = #tpu.pipeline_mode<synchronous>, transform_indices = @transform_5, window_bounds = array<i64: 128, 128>}, {pipeline_mode = #tpu.pipeline_mode<synchronous>, transform_indices = @transform_6, window_bounds = array<i64: 1, 128>}, {pipeline_mode = #tpu.pipeline_mode<synchronous>, transform_indices = @transform_7, window_bounds = array<i64: 128, 128>}, {pipeline_mode = #tpu.pipeline_mode<synchronous>, transform_indices = @transform_8, window_bounds = array<i64: 1, 128>}, {transform_indices = @transform_9, window_bounds = array<i64: 128, 128>}]} {
    %c0 = arith.constant 0 : index
    %c0_0 = arith.constant 0 : index
    %0 = vector.load %arg1[%c0, %c0_0] : memref<128x32xf32, #tpu.memory_space<vmem>>, vector<128x32xf32>
    %1 = arith.truncf %0 : vector<128x32xf32> to vector<128x32xbf16>
    %c0_1 = arith.constant 0 : index
    %c0_2 = arith.constant 0 : index
    %2 = vector.load %arg2[%c0_1, %c0_2] : memref<32x128xbf16, #tpu.memory_space<vmem>>, vector<32x128xbf16>
    %cst = arith.constant dense<0.000000e+00> : vector<128x128xf32>
    %3 = tpu.matmul %1, %2, %cst {dimension_numbers = #tpu.dot_dimension_numbers<[1], [0], [0], [1], [0, 0, 1, 1], [], []>} : vector<128x32xbf16>, vector<32x128xbf16>, vector<128x128xf32> -> vector<128x128xf32>
    %c0_3 = arith.constant 0 : index
    %c0_4 = arith.constant 0 : index
    %4 = vector.load %arg3[%c0_3, %c0_4] : memref<1x128xf32, #tpu.memory_space<vmem>>, vector<1x128xf32>
    %5 = vector.broadcast %4 : vector<1x128xf32> to vector<128x128xf32>
    %6 = arith.addf %3, %5 : vector<128x128xf32>
    %cst_5 = arith.constant 0.000000e+00 : f32
    %7 = vector.broadcast %cst_5 : f32 to vector<128x128xf32>
    %8 = arith.maximumf %6, %7 : vector<128x128xf32>
    %9 = arith.truncf %8 : vector<128x128xf32> to vector<128x128xbf16>
    %c0_6 = arith.constant 0 : index
    %c0_7 = arith.constant 0 : index
    %10 = vector.load %arg4[%c0_6, %c0_7] : memref<128x128xbf16, #tpu.memory_space<vmem>>, vector<128x128xbf16>
    %cst_8 = arith.constant dense<0.000000e+00> : vector<128x128xf32>
    %11 = tpu.matmul %9, %10, %cst_8 {dimension_numbers = #tpu.dot_dimension_numbers<[1], [0], [0], [1], [0, 0, 1, 1], [], []>} : vector<128x128xbf16>, vector<128x128xbf16>, vector<128x128xf32> -> vector<128x128xf32>
    %c0_9 = arith.constant 0 : index
    %c0_10 = arith.constant 0 : index
    %12 = vector.load %arg5[%c0_9, %c0_10] : memref<1x128xf32, #tpu.memory_space<vmem>>, vector<1x128xf32>
    %13 = vector.broadcast %12 : vector<1x128xf32> to vector<128x128xf32>
    %14 = arith.addf %11, %13 : vector<128x128xf32>
    %cst_11 = arith.constant 0.000000e+00 : f32
    %15 = vector.broadcast %cst_11 : f32 to vector<128x128xf32>
    %16 = arith.maximumf %14, %15 : vector<128x128xf32>
    %17 = arith.truncf %16 : vector<128x128xf32> to vector<128x128xbf16>
    %c0_12 = arith.constant 0 : index
    %c0_13 = arith.constant 0 : index
    %18 = vector.load %arg6[%c0_12, %c0_13] : memref<128x128xbf16, #tpu.memory_space<vmem>>, vector<128x128xbf16>
    %cst_14 = arith.constant dense<0.000000e+00> : vector<128x128xf32>
    %19 = tpu.matmul %17, %18, %cst_14 {dimension_numbers = #tpu.dot_dimension_numbers<[1], [0], [0], [1], [0, 0, 1, 1], [], []>} : vector<128x128xbf16>, vector<128x128xbf16>, vector<128x128xf32> -> vector<128x128xf32>
    %c0_15 = arith.constant 0 : index
    %c0_16 = arith.constant 0 : index
    %20 = vector.load %arg7[%c0_15, %c0_16] : memref<1x128xf32, #tpu.memory_space<vmem>>, vector<1x128xf32>
    %21 = vector.broadcast %20 : vector<1x128xf32> to vector<128x128xf32>
    %22 = arith.addf %19, %21 : vector<128x128xf32>
    %cst_17 = arith.constant 0.000000e+00 : f32
    %23 = vector.broadcast %cst_17 : f32 to vector<128x128xf32>
    %24 = arith.maximumf %22, %23 : vector<128x128xf32>
    %25 = arith.truncf %24 : vector<128x128xf32> to vector<128x128xbf16>
    %c0_18 = arith.constant 0 : index
    %c0_19 = arith.constant 0 : index
    %26 = vector.load %arg8[%c0_18, %c0_19] : memref<128x128xbf16, #tpu.memory_space<vmem>>, vector<128x128xbf16>
    %cst_20 = arith.constant dense<0.000000e+00> : vector<128x128xf32>
    %27 = tpu.matmul %25, %26, %cst_20 {dimension_numbers = #tpu.dot_dimension_numbers<[1], [0], [0], [1], [0, 0, 1, 1], [], []>} : vector<128x128xbf16>, vector<128x128xbf16>, vector<128x128xf32> -> vector<128x128xf32>
    %c0_21 = arith.constant 0 : index
    %c0_22 = arith.constant 0 : index
    %28 = vector.load %arg9[%c0_21, %c0_22] : memref<1x128xf32, #tpu.memory_space<vmem>>, vector<1x128xf32>
    %29 = vector.broadcast %28 : vector<1x128xf32> to vector<128x128xf32>
    %30 = arith.addf %27, %29 : vector<128x128xf32>
    %c0_23 = arith.constant 0 : index
    %c0_24 = arith.constant 0 : index
    %31 = vector.load %arg10[%c0_23, %c0_24] : memref<128x128xf32, #tpu.memory_space<vmem>>, vector<128x128xf32>
    tpu.vector_store %arg10[%c0_23, %c0_24], %30 {strides = array<i32>} : memref<128x128xf32, #tpu.memory_space<vmem>>, vector<128x128xf32>,
    return
  }
  func.func @transform_0(%arg0: i32) -> (i32, i32) {
    %c0_i32 = arith.constant 0 : i32
    %c0_i32_0 = arith.constant 0 : i32
    return %arg0, %c0_i32 : i32, i32
  }
  func.func @transform_1(%arg0: i32) -> (i32, i32) {
    %c0_i32 = arith.constant 0 : i32
    %c0_i32_0 = arith.constant 0 : i32
    %c0_i32_1 = arith.constant 0 : i32
    return %c0_i32, %c0_i32_0 : i32, i32
  }
  func.func @transform_2(%arg0: i32) -> (i32, i32) {
    %c0_i32 = arith.constant 0 : i32
    %c0_i32_0 = arith.constant 0 : i32
    %c0_i32_1 = arith.constant 0 : i32
    return %c0_i32, %c0_i32_0 : i32, i32
  }
  func.func @transform_3(%arg0: i32) -> (i32, i32) {
    %c0_i32 = arith.constant 0 : i32
    %c0_i32_0 = arith.constant 0 : i32
    %c0_i32_1 = arith.constant 0 : i32
    return %c0_i32, %c0_i32_0 : i32, i32
  }
  func.func @transform_4(%arg0: i32) -> (i32, i32) {
    %c0_i32 = arith.constant 0 : i32
    %c0_i32_0 = arith.constant 0 : i32
    %c0_i32_1 = arith.constant 0 : i32
    return %c0_i32, %c0_i32_0 : i32, i32
  }
  func.func @transform_5(%arg0: i32) -> (i32, i32) {
    %c0_i32 = arith.constant 0 : i32
    %c0_i32_0 = arith.constant 0 : i32
    %c0_i32_1 = arith.constant 0 : i32
    return %c0_i32, %c0_i32_0 : i32, i32
  }
  func.func @transform_6(%arg0: i32) -> (i32, i32) {
    %c0_i32 = arith.constant 0 : i32
    %c0_i32_0 = arith.constant 0 : i32
    %c0_i32_1 = arith.constant 0 : i32
    return %c0_i32, %c0_i32_0 : i32, i32
  }
  func.func @transform_7(%arg0: i32) -> (i32, i32) {
    %c0_i32 = arith.constant 0 : i32
    %c0_i32_0 = arith.constant 0 : i32
    %c0_i32_1 = arith.constant 0 : i32
    return %c0_i32, %c0_i32_0 : i32, i32
  }
  func.func @transform_8(%arg0: i32) -> (i32, i32) {
    %c0_i32 = arith.constant 0 : i32
    %c0_i32_0 = arith.constant 0 : i32
    %c0_i32_1 = arith.constant 0 : i32
    return %c0_i32, %c0_i32_0 : i32, i32
  }
  func.func @transform_9(%arg0: i32) -> (i32, i32) {
    %c0_i32 = arith.constant 0 : i32
    %c0_i32_0 = arith.constant 0 : i32
    return %arg0, %c0_i32 : i32, i32
  }
}

</mosaic_0001>

<llo_original>
// kernel: vanilla_mlp_forward.1
$region0: #{vanilla_mlp_forward.1}
  #allocation0 [shape = 'u32[]', space=smem, size = 0x4, offset = 0x4, fixed_abs, tag = 'smem constant byte address 0x4 - core index']
  #allocation1 [shape = 'u32[72,128]{1,0:T(1,128)}', space=vmem, size = 0x9000, scoped, tag = 'internal scratch']
  %s0 = inlined_call_operand.vmem [shape: f32[256,32], index: 0, kind: input, shape index: {}]
  %s1 = inlined_call_operand.vmem [shape: bf16[32,128], index: 1, kind: input, shape index: {}]
  %s2 = inlined_call_operand.vmem [shape: f32[1,128], index: 2, kind: input, shape index: {}]
  %s3 = inlined_call_operand.vmem [shape: bf16[128,128], index: 3, kind: input, shape index: {}]
  %s4 = inlined_call_operand.vmem [shape: f32[1,128], index: 4, kind: input, shape index: {}]
  %s5 = inlined_call_operand.vmem [shape: bf16[128,128], index: 5, kind: input, shape index: {}]
  %s6 = inlined_call_operand.vmem [shape: f32[1,128], index: 6, kind: input, shape index: {}]
  %s7 = inlined_call_operand.vmem [shape: bf16[128,128], index: 7, kind: input, shape index: {}]
  %s8 = inlined_call_operand.vmem [shape: f32[1,128], index: 8, kind: input, shape index: {}]
  %s9 = inlined_call_operand.vmem [shape: f32[256,128], index: 9, kind: output, shape index: {}]
  %s10 = sld [smem:[#allocation0]]
  $region69: #{vanilla_mlp_forward.1} parent=0
    _
  %s12 = ssub.s32 1, %s10
  %s13 = scalar_select 0, %s12, %s10
  loop: start=0, step=1, limit=4
  $region2: #{vanilla_mlp_forward.1} parent=0 // loop_pre_header
    _
  $region3: #{vanilla_mlp_forward.1} parent=0 // loop_header
    %s15 = sphi 0, %s19
    %p16 = scmp.ge.s32.totalorder %s15, 4
    %s25 = sphi 0, %s27
    %s28 = sphi 0, %s25
    %s29 = sphi 0, %s28
    %s45 = sphi 0, %s29
    %s49 = sphi 0, %s49
    %s51 = sphi 0, %s49
    %s52 = sphi 0, %s51
    %s66 = sphi 0, %s52
    %s70 = sphi 0, %s70
    %s72 = sphi 0, %s70
    %s73 = sphi 0, %s72
    %s87 = sphi 0, %s73
    %s91 = sphi 0, %s91
    %s93 = sphi 0, %s91
    %s94 = sphi 0, %s93
    %s108 = sphi 0, %s94
    %s112 = sphi 0, %s112
    %s114 = sphi 0, %s112
    %s115 = sphi 0, %s114
    %s129 = sphi 0, %s115
    %s133 = sphi 0, %s133
    %s135 = sphi 0, %s133
    %s136 = sphi 0, %s135
    %s150 = sphi 0, %s136
    %s154 = sphi 0, %s154
    %s156 = sphi 0, %s154
    %s157 = sphi 0, %s156
    %s171 = sphi 0, %s157
    %s175 = sphi 0, %s175
    %s177 = sphi 0, %s175
    %s178 = sphi 0, %s177
    %s192 = sphi 0, %s178
    %s196 = sphi 0, %s196
    %s198 = sphi 0, %s196
    %s199 = sphi 0, %s198
    %s213 = sphi 0, %s199
    %s219 = sphi 0, %s221
    %s222 = sphi 0, %s219
    %s223 = sphi 0, %s222
    %s239 = sphi 0, %s223
  $region4: #{vanilla_mlp_forward.1} parent=0 // loop_header_branch
    %18 = sbr.rel (%p16) target = $region8
  $region5: #{vanilla_mlp_forward.1} parent=0 // loop_body
    %s20 = ssub.s32 %s15, 1
    %s21 = ssub.s32 %s15, 2
    %s22 = sadd.s32 %s15, 1
    %s23 = ssub.s32 %s15, %s22
    %p24 = scmp.eq.s32.totalorder %s23, 0
    %s26 = sadd.s32 %s25, 1
    %s27 = scalar_select %p24, %s25, %s26
    %p30 = pneg %p24
    %p31 = scmp.eq.s32.totalorder %s15, 1
    %p32 = por %p30, %p31
    %p33 = scmp.ne.s32.totalorder %s25, %s28
    %p34 = scmp.eq.s32.totalorder %s15, 0
    %p35 = por %p33, %p34
    %p36 = scmp.ne.s32.totalorder %s25, %s28
    %p37 = scmp.eq.s32.totalorder %s20, 1
    %p38 = por %p36, %p37
    %p39 = scmp.ne.s32.totalorder %s28, %s29
    %p40 = scmp.eq.s32.totalorder %s20, 0
    %p41 = por %p39, %p40
    %p42 = scmp.ne.s32.totalorder %s28, %s29
    %p43 = scmp.eq.s32.totalorder %s21, 1
    %p44 = por %p42, %p43
    %p46 = scmp.ne.s32.totalorder %s29, %s45
    %p47 = scmp.eq.s32.totalorder %s21, 0
    %p48 = por %p46, %p47
    %s50 = sadd.s32 %s49, 1
    %p53 = scmp.eq.s32.totalorder %s15, 1
    %p54 = scmp.ne.s32.totalorder %s49, %s51
    %p55 = scmp.eq.s32.totalorder %s15, 0
    %p56 = por %p54, %p55
    %p57 = scmp.ne.s32.totalorder %s49, %s51
    %p58 = scmp.eq.s32.totalorder %s20, 1
    %p59 = por %p57, %p58
    %p60 = scmp.ne.s32.totalorder %s51, %s52
    %p61 = scmp.eq.s32.totalorder %s20, 0
    %p62 = por %p60, %p61
    %p63 = scmp.ne.s32.totalorder %s51, %s52
    %p64 = scmp.eq.s32.totalorder %s21, 1
    %p65 = por %p63, %p64
    %p67 = scmp.ne.s32.totalorder %s52, %s66
    %p68 = scmp.eq.s32.totalorder %s21, 0
    %p69 = por %p67, %p68
    %s71 = sadd.s32 %s70, 1
    %p74 = scmp.eq.s32.totalorder %s15, 1
    %p75 = scmp.ne.s32.totalorder %s70, %s72
    %p76 = scmp.eq.s32.totalorder %s15, 0
    %p77 = por %p75, %p76
    %p78 = scmp.ne.s32.totalorder %s70, %s72
    %p79 = scmp.eq.s32.totalorder %s20, 1
    %p80 = por %p78, %p79
    %p81 = scmp.ne.s32.totalorder %s72, %s73
    %p82 = scmp.eq.s32.totalorder %s20, 0
    %p83 = por %p81, %p82
    %p84 = scmp.ne.s32.totalorder %s72, %s73
    %p85 = scmp.eq.s32.totalorder %s21, 1
    %p86 = por %p84, %p85
    %p88 = scmp.ne.s32.totalorder %s73, %s87
    %p89 = scmp.eq.s32.totalorder %s21, 0
    %p90 = por %p88, %p89
    %s92 = sadd.s32 %s91, 1
    %p95 = scmp.eq.s32.totalorder %s15, 1
    %p96 = scmp.ne.s32.totalorder %s91, %s93
    %p97 = scmp.eq.s32.totalorder %s15, 0
    %p98 = por %p96, %p97
    %p99 = scmp.ne.s32.totalorder %s91, %s93
    %p100 = scmp.eq.s32.totalorder %s20, 1
    %p101 = por %p99, %p100
    %p102 = scmp.ne.s32.totalorder %s93, %s94
    %p103 = scmp.eq.s32.totalorder %s20, 0
    %p104 = por %p102, %p103
    %p105 = scmp.ne.s32.totalorder %s93, %s94
    %p106 = scmp.eq.s32.totalorder %s21, 1
    %p107 = por %p105, %p106
    %p109 = scmp.ne.s32.totalorder %s94, %s108
    %p110 = scmp.eq.s32.totalorder %s21, 0
    %p111 = por %p109, %p110
    %s113 = sadd.s32 %s112, 1
    %p116 = scmp.eq.s32.totalorder %s15, 1
    %p117 = scmp.ne.s32.totalorder %s112, %s114
    %p118 = scmp.eq.s32.totalorder %s15, 0
    %p119 = por %p117, %p118
    %p120 = scmp.ne.s32.totalorder %s112, %s114
    %p121 = scmp.eq.s32.totalorder %s20, 1
    %p122 = por %p120, %p121
    %p123 = scmp.ne.s32.totalorder %s114, %s115
    %p124 = scmp.eq.s32.totalorder %s20, 0
    %p125 = por %p123, %p124
    %p126 = scmp.ne.s32.totalorder %s114, %s115
    %p127 = scmp.eq.s32.totalorder %s21, 1
    %p128 = por %p126, %p127
    %p130 = scmp.ne.s32.totalorder %s115, %s129
    %p131 = scmp.eq.s32.totalorder %s21, 0
    %p132 = por %p130, %p131
    %s134 = sadd.s32 %s133, 1
    %p137 = scmp.eq.s32.totalorder %s15, 1
    %p138 = scmp.ne.s32.totalorder %s133, %s135
    %p139 = scmp.eq.s32.totalorder %s15, 0
    %p140 = por %p138, %p139
    %p141 = scmp.ne.s32.totalorder %s133, %s135
    %p142 = scmp.eq.s32.totalorder %s20, 1
    %p143 = por %p141, %p142
    %p144 = scmp.ne.s32.totalorder %s135, %s136
    %p145 = scmp.eq.s32.totalorder %s20, 0
    %p146 = por %p144, %p145
    %p147 = scmp.ne.s32.totalorder %s135, %s136
    %p148 = scmp.eq.s32.totalorder %s21, 1
    %p149 = por %p147, %p148
    %p151 = scmp.ne.s32.totalorder %s136, %s150
    %p152 = scmp.eq.s32.totalorder %s21, 0
    %p153 = por %p151, %p152
    %s155 = sadd.s32 %s154, 1
    %p158 = scmp.eq.s32.totalorder %s15, 1
    %p159 = scmp.ne.s32.totalorder %s154, %s156
    %p160 = scmp.eq.s32.totalorder %s15, 0
    %p161 = por %p159, %p160
    %p162 = scmp.ne.s32.totalorder %s154, %s156
    %p163 = scmp.eq.s32.totalorder %s20, 1
    %p164 = por %p162, %p163
    %p165 = scmp.ne.s32.totalorder %s156, %s157
    %p166 = scmp.eq.s32.totalorder %s20, 0
    %p167 = por %p165, %p166
    %p168 = scmp.ne.s32.totalorder %s156, %s157
    %p169 = scmp.eq.s32.totalorder %s21, 1
    %p170 = por %p168, %p169
    %p172 = scmp.ne.s32.totalorder %s157, %s171
    %p173 = scmp.eq.s32.totalorder %s21, 0
    %p174 = por %p172, %p173
    %s176 = sadd.s32 %s175, 1
    %p179 = scmp.eq.s32.totalorder %s15, 1
    %p180 = scmp.ne.s32.totalorder %s175, %s177
    %p181 = scmp.eq.s32.totalorder %s15, 0
    %p182 = por %p180, %p181
    %p183 = scmp.ne.s32.totalorder %s175, %s177
    %p184 = scmp.eq.s32.totalorder %s20, 1
    %p185 = por %p183, %p184
    %p186 = scmp.ne.s32.totalorder %s177, %s178
    %p187 = scmp.eq.s32.totalorder %s20, 0
    %p188 = por %p186, %p187
    %p189 = scmp.ne.s32.totalorder %s177, %s178
    %p190 = scmp.eq.s32.totalorder %s21, 1
    %p191 = por %p189, %p190
    %p193 = scmp.ne.s32.totalorder %s178, %s192
    %p194 = scmp.eq.s32.totalorder %s21, 0
    %p195 = por %p193, %p194
    %s197 = sadd.s32 %s196, 1
    %p200 = scmp.eq.s32.totalorder %s15, 1
    %p201 = scmp.ne.s32.totalorder %s196, %s198
    %p202 = scmp.eq.s32.totalorder %s15, 0
    %p203 = por %p201, %p202
    %p204 = scmp.ne.s32.totalorder %s196, %s198
    %p205 = scmp.eq.s32.totalorder %s20, 1
    %p206 = por %p204, %p205
    %p207 = scmp.ne.s32.totalorder %s198, %s199
    %p208 = scmp.eq.s32.totalorder %s20, 0
    %p209 = por %p207, %p208
    %p210 = scmp.ne.s32.totalorder %s198, %s199
    %p211 = scmp.eq.s32.totalorder %s21, 1
    %p212 = por %p210, %p211
    %p214 = scmp.ne.s32.totalorder %s199, %s213
    %p215 = scmp.eq.s32.totalorder %s21, 0
    %p216 = por %p214, %p215
    %s217 = ssub.s32 %s15, %s22
    %p218 = scmp.eq.s32.totalorder %s217, 0
    %s220 = sadd.s32 %s219, 1
    %s221 = scalar_select %p218, %s219, %s220
    %p224 = pneg %p218
    %p225 = scmp.eq.s32.totalorder %s15, 1
    %p226 = por %p224, %p225
    %p227 = scmp.ne.s32.totalorder %s219, %s222
    %p228 = scmp.eq.s32.totalorder %s15, 0
    %p229 = por %p227, %p228
    %p230 = scmp.ne.s32.totalorder %s219, %s222
    %p231 = scmp.eq.s32.totalorder %s20, 1
    %p232 = por %p230, %p231
    %p233 = scmp.ne.s32.totalorder %s222, %s223
    %p234 = scmp.eq.s32.totalorder %s20, 0
    %p235 = por %p233, %p234
    %p236 = scmp.ne.s32.totalorder %s222, %s223
    %p237 = scmp.eq.s32.totalorder %s21, 1
    %p238 = por %p236, %p237
    %p240 = scmp.ne.s32.totalorder %s223, %s239
    %p241 = scmp.eq.s32.totalorder %s21, 0
    %p242 = por %p240, %p241
    %p243 = scmp.le.s32.totalorder 1, %s15
    %p244 = scmp.lt.s32.totalorder %s15, 3
    %p245 = pnand %p243, %p244
    %p246 = pneg %p245
    // Predicated region
    $region9: #{vanilla_mlp_forward.1} parent=5 // pred_check
      _
    $region10: #{vanilla_mlp_forward.1} parent=5 // pred_check_branch
      %248 = sbr.rel (%p245) target = $region12
    $region11: #{vanilla_mlp_forward.1} parent=5 // pred_region
      %s249 = ssub.s32 %s15, 1
      // Predicated region
      $region13: #{vanilla_mlp_forward.1} parent=11 // pred_check
        %p250 = pneg %p62
      $region14: #{vanilla_mlp_forward.1} parent=11 // pred_check_branch
        %252 = sbr.rel (%p250) target = $region16
      $region15: #{vanilla_mlp_forward.1} parent=11 // pred_region
        _
      $region16: #{vanilla_mlp_forward.1} parent=11 // pred_fallthru
        _
      // Predicated region
      $region17: #{vanilla_mlp_forward.1} parent=11 // pred_check
        %p253 = pneg %p83
      $region18: #{vanilla_mlp_forward.1} parent=11 // pred_check_branch
        %255 = sbr.rel (%p253) target = $region20
      $region19: #{vanilla_mlp_forward.1} parent=11 // pred_region
        _
      $region20: #{vanilla_mlp_forward.1} parent=11 // pred_fallthru
        _
      // Predicated region
      $region21: #{vanilla_mlp_forward.1} parent=11 // pred_check
        %p256 = pneg %p104
      $region22: #{vanilla_mlp_forward.1} parent=11 // pred_check_branch
        %258 = sbr.rel (%p256) target = $region24
      $region23: #{vanilla_mlp_forward.1} parent=11 // pred_region
        _
      $region24: #{vanilla_mlp_forward.1} parent=11 // pred_fallthru
        _
      // Predicated region
      $region25: #{vanilla_mlp_forward.1} parent=11 // pred_check
        %p259 = pneg %p125
      $region26: #{vanilla_mlp_forward.1} parent=11 // pred_check_branch
        %261 = sbr.rel (%p259) target = $region28
      $region27: #{vanilla_mlp_forward.1} parent=11 // pred_region
        _
      $region28: #{vanilla_mlp_forward.1} parent=11 // pred_fallthru
        _
      // Predicated region
      $region29: #{vanilla_mlp_forward.1} parent=11 // pred_check
        %p262 = pneg %p146
      $region30: #{vanilla_mlp_forward.1} parent=11 // pred_check_branch
        %264 = sbr.rel (%p262) target = $region32
      $region31: #{vanilla_mlp_forward.1} parent=11 // pred_region
        _
      $region32: #{vanilla_mlp_forward.1} parent=11 // pred_fallthru
        _
      // Predicated region
      $region33: #{vanilla_mlp_forward.1} parent=11 // pred_check
        %p265 = pneg %p167
      $region34: #{vanilla_mlp_forward.1} parent=11 // pred_check_branch
        %267 = sbr.rel (%p265) target = $region36
      $region35: #{vanilla_mlp_forward.1} parent=11 // pred_region
        _
      $region36: #{vanilla_mlp_forward.1} parent=11 // pred_fallthru
        _
      // Predicated region
      $region37: #{vanilla_mlp_forward.1} parent=11 // pred_check
        %p268 = pneg %p188
      $region38: #{vanilla_mlp_forward.1} parent=11 // pred_check_branch
        %270 = sbr.rel (%p268) target = $region40
      $region39: #{vanilla_mlp_forward.1} parent=11 // pred_region
        _
      $region40: #{vanilla_mlp_forward.1} parent=11 // pred_fallthru
        _
      // Predicated region
      $region41: #{vanilla_mlp_forward.1} parent=11 // pred_check
        %p271 = pneg %p209
      $region42: #{vanilla_mlp_forward.1} parent=11 // pred_check_branch
        %273 = sbr.rel (%p271) target = $region44
      $region43: #{vanilla_mlp_forward.1} parent=11 // pred_region
        _
      $region44: #{vanilla_mlp_forward.1} parent=11 // pred_fallthru
        _
    $region12: #{vanilla_mlp_forward.1} parent=5 // pred_fallthru
      _
    %p274 = scmp.lt.s32.totalorder %s15, 2
    // Predicated region
    $region45: #{vanilla_mlp_forward.1} parent=5 // pred_check
      %p275 = pneg %p274
    $region46: #{vanilla_mlp_forward.1} parent=5 // pred_check_branch
      %277 = sbr.rel (%p275) target = $region48
    $region47: #{vanilla_mlp_forward.1} parent=5 // pred_region
      // Predicated region
      $region49: #{vanilla_mlp_forward.1} parent=47 // pred_check
        %p278 = pneg %p35
      $region50: #{vanilla_mlp_forward.1} parent=47 // pred_check_branch
        %280 = sbr.rel (%p278) target = $region52
      $region51: #{vanilla_mlp_forward.1} parent=47 // pred_region
        %s281 = smul.u32 16, %s15
        %p282 = scmp.lt.s32.totalorder %s281, 31
        %s283 = scalar_select %p282, %s281, 31
        %s284 = smul.addr %s283, 8
        %s285 = scalar_lea.vmem %s0, %s284
        %s286 = smul.u32 16, %s15
      $region52: #{vanilla_mlp_forward.1} parent=47 // pred_fallthru
        _
    $region48: #{vanilla_mlp_forward.1} parent=5 // pred_fallthru
      _
    %p287 = scmp.le.s32.totalorder 1, %s15
    %p288 = scmp.lt.s32.totalorder %s15, 3
    %p289 = pnand %p287, %p288
    %p290 = pneg %p289
    // Predicated region
    $region53: #{vanilla_mlp_forward.1} parent=5 // pred_check
      _
    $region54: #{vanilla_mlp_forward.1} parent=5 // pred_check_branch
      %292 = sbr.rel (%p289) target = $region56
    $region55: #{vanilla_mlp_forward.1} parent=5 // pred_region
      %s293 = ssub.s32 %s15, 1
      %s294 = smul.u32 16, %s20
      %p295 = scmp.lt.s32.totalorder %s294, 31
      %s296 = scalar_select %p295, %s294, 31
      %s297 = smul.addr %s296, 8
      %s298 = scalar_lea.vmem %s0, %s297
      %p299 = pneg %p41
      %p300 = pneg %p38
      %p301 = pneg %p62
      %p302 = pneg %p59
      %p303 = pneg %p83
      %p304 = pneg %p80
      %p305 = pneg %p104
      %p306 = pneg %p101
      %p307 = pneg %p125
      %p308 = pneg %p122
      %p309 = pneg %p146
      %p310 = pneg %p143
      %p311 = pneg %p167
      %p312 = pneg %p164
      %p313 = pneg %p188
      %p314 = pneg %p185
      %p315 = pneg %p209
      %p316 = pneg %p206
      %p317 = pneg %p235
      %p318 = pneg %p232
      %s319 = smul.u32 16, %s20
      %p320 = scmp.lt.s32.totalorder %s319, 31
      %s321 = scalar_select %p320, %s319, 31
      %s322 = smul.addr %s321, 8
      %s323 = scalar_lea.vmem %s9, %s322
      %s324 = smul.u32 16, %s20
      %p325 = scmp.lt.s32.totalorder %s324, 31
      %s326 = scalar_select %p325, %s324, 31
      %s327 = smul.addr %s326, 8
      %s328 = scalar_lea.vmem %s0, %s327
      %s329 = smul.u32 16, %s20
      %s330 = smul.u32 16, %s20
      %p331 = scmp.lt.s32.totalorder %s330, 31
      %s332 = scalar_select %p331, %s330, 31
      %s333 = smul.addr %s332, 8
      %s334 = scalar_lea.vmem %s9, %s333
      %s335 = smul.u32 16, %s20
      %v337 = vld [vmem:[%s328] sm:$0xff]
      %v338 = vld [vmem:[%s328 + $0x8] sm:$0xff]
      %v339 = vld [vmem:[%s328 + $0x10] sm:$0xff]
      %v340 = vld [vmem:[%s328 + $0x18] sm:$0xff]
      %v341 = vld [vmem:[%s328 + $0x20] sm:$0xff]
      %v342 = vld [vmem:[%s328 + $0x28] sm:$0xff]
      %v343 = vld [vmem:[%s328 + $0x30] sm:$0xff]
      %v344 = vld [vmem:[%s328 + $0x38] sm:$0xff]
      %v345 = vld [vmem:[%s328 + $0x40] sm:$0xff]
      %v346 = vld [vmem:[%s328 + $0x48] sm:$0xff]
      %v347 = vld [vmem:[%s328 + $0x50] sm:$0xff]
      %v348 = vld [vmem:[%s328 + $0x58] sm:$0xff]
      %v349 = vld [vmem:[%s328 + $0x60] sm:$0xff]
      %v350 = vld [vmem:[%s328 + $0x68] sm:$0xff]
      %v351 = vld [vmem:[%s328 + $0x70] sm:$0xff]
      %v352 = vld [vmem:[%s328 + $0x78] sm:$0xff]
      %v353 = vpack.c.bf16 %v338, %v337
      %v354 = vpack.c.bf16 %v340, %v339
      %v355 = vpack.c.bf16 %v342, %v341
      %v356 = vpack.c.bf16 %v344, %v343
      %v357 = vpack.c.bf16 %v346, %v345
      %v358 = vpack.c.bf16 %v348, %v347
      %v359 = vpack.c.bf16 %v350, %v349
      %v360 = vpack.c.bf16 %v352, %v351
      %v361 = vld [vmem:[%s1] sm:$0xf]
      %v362 = vld [vmem:[%s1 + $0x4] sm:$0xf]
      %v363 = vld [vmem:[%s1 + $0x8] sm:$0xf]
      %v364 = vld [vmem:[%s1 + $0xc] sm:$0xf]
      %v365 = vld [vmem:[%s2] sm:$0x1]
      %v367 = vperm.slane %v365, 0
      %v373 = vunpack.c.l.b16 %v361
      %v374 = vunpack.c.l.b16 %v362
      %v375 = vunpack.c.l.b16 %v363
      %v376 = vunpack.c.l.b16 %v364
      %v377 = vpack.c.b16 %v374, %v373
      %v378 = vpack.c.b16 %v376, %v375
      %vm381 = vcmask 261120
      %v383 = vsel %vm381, %v353, 0
      %v386 = vsel %vm381, %v354, 0
      %v389 = vsel %vm381, %v355, 0
      %v392 = vsel %vm381, %v356, 0
      %v395 = vsel %vm381, %v357, 0
      %v398 = vsel %vm381, %v358, 0
      %v401 = vsel %vm381, %v359, 0
      %v404 = vsel %vm381, %v360, 0
      %406 = vmatpush.bf16.msra.mxu0 0
      %407 = vmatpush.bf16.msra.mxu0 0
      %408 = vmatpush.bf16.msra.mxu0 0
      %409 = vmatpush.bf16.msra.mxu0 0
      %410 = vmatpush.bf16.msra.mxu0 0
      %411 = vmatpush.bf16.msra.mxu0 0
      %412 = vmatpush.bf16.msra.mxu0 %v378
      %413 = vmatpush.bf16.msra.mxu0 %v377
      %414 = vmatmul.bf16.gmra.mxu0 %v383
      %v415 = vpop.f32.mrf.mxu0
      %v416 = vadd.f32 %v367, %v415
      %v417 = vpop.f32.mrf.mxu0
      %v418 = vadd.f32 %v367, %v417
      %419 = vmatmul.bf16.gmra.mxu0 %v386
      %v420 = vpop.f32.mrf.mxu0
      %v421 = vadd.f32 %v367, %v420
      %v422 = vpop.f32.mrf.mxu0
      %v423 = vadd.f32 %v367, %v422
      %424 = vmatmul.bf16.gmra.mxu0 %v389
      %v425 = vpop.f32.mrf.mxu0
      %v426 = vadd.f32 %v367, %v425
      %v427 = vpop.f32.mrf.mxu0
      %v428 = vadd.f32 %v367, %v427
      %429 = vmatmul.bf16.gmra.mxu0 %v392
      %v430 = vpop.f32.mrf.mxu0
      %v431 = vadd.f32 %v367, %v430
      %v432 = vpop.f32.mrf.mxu0
      %v433 = vadd.f32 %v367, %v432
      %434 = vmatmul.bf16.gmra.mxu0 %v395
      %v435 = vpop.f32.mrf.mxu0
      %v436 = vadd.f32 %v367, %v435
      %v437 = vpop.f32.mrf.mxu0
      %v438 = vadd.f32 %v367, %v437
      %439 = vmatmul.bf16.gmra.mxu0 %v398
      %v440 = vpop.f32.mrf.mxu0
      %v441 = vadd.f32 %v367, %v440
      %v442 = vpop.f32.mrf.mxu0
      %v443 = vadd.f32 %v367, %v442
      %444 = vmatmul.bf16.gmra.mxu0 %v401
      %v445 = vpop.f32.mrf.mxu0
      %v446 = vadd.f32 %v367, %v445
      %v447 = vpop.f32.mrf.mxu0
      %v448 = vadd.f32 %v367, %v447
      %449 = vmatmul.bf16.gmra.mxu0 %v404
      %v450 = vpop.f32.mrf.mxu0
      %v451 = vadd.f32 %v367, %v450
      %v452 = vpop.f32.mrf.mxu0
      %v453 = vadd.f32 %v367, %v452
      %454 = vdwg.mxu0
      %v455 = vmax.f32 %v416, 0.0
      %v456 = vmax.f32 %v418, 0.0
      %v457 = vmax.f32 %v421, 0.0
      %v458 = vmax.f32 %v423, 0.0
      %v459 = vmax.f32 %v426, 0.0
      %v460 = vmax.f32 %v428, 0.0
      %v461 = vmax.f32 %v431, 0.0
      %v462 = vmax.f32 %v433, 0.0
      %v463 = vmax.f32 %v436, 0.0
      %v464 = vmax.f32 %v438, 0.0
      %v465 = vmax.f32 %v441, 0.0
      %v466 = vmax.f32 %v443, 0.0
      %v467 = vmax.f32 %v446, 0.0
      %v468 = vmax.f32 %v448, 0.0
      %v469 = vmax.f32 %v451, 0.0
      %v470 = vmax.f32 %v453, 0.0
      %v471 = vpack.c.bf16 %v456, %v455
      %v472 = vpack.c.bf16 %v458, %v457
      %v473 = vpack.c.bf16 %v460, %v459
      %v474 = vpack.c.bf16 %v462, %v461
      %v475 = vpack.c.bf16 %v464, %v463
      %v476 = vpack.c.bf16 %v466, %v465
      %v477 = vpack.c.bf16 %v468, %v467
      %v478 = vpack.c.bf16 %v470, %v469
      %v479 = vld [vmem:[%s3] sm:$0xf]
      %v480 = vld [vmem:[%s3 + $0x4] sm:$0xf]
      %v481 = vld [vmem:[%s3 + $0x8] sm:$0xf]
      %v482 = vld [vmem:[%s3 + $0xc] sm:$0xf]
      %v483 = vld [vmem:[%s3 + $0x10] sm:$0xf]
      %v484 = vld [vmem:[%s3 + $0x14] sm:$0xf]
      %v485 = vld [vmem:[%s3 + $0x18] sm:$0xf]
      %v486 = vld [vmem:[%s3 + $0x1c] sm:$0xf]
      %v487 = vld [vmem:[%s3 + $0x20] sm:$0xf]
      %v488 = vld [vmem:[%s3 + $0x24] sm:$0xf]
      %v489 = vld [vmem:[%s3 + $0x28] sm:$0xf]
      %v490 = vld [vmem:[%s3 + $0x2c] sm:$0xf]
      %v491 = vld [vmem:[%s3 + $0x30] sm:$0xf]
      %v492 = vld [vmem:[%s3 + $0x34] sm:$0xf]
      %v493 = vld [vmem:[%s3 + $0x38] sm:$0xf]
      %v494 = vld [vmem:[%s3 + $0x3c] sm:$0xf]
      %v495 = vld [vmem:[%s4] sm:$0x1]
      %v497 = vperm.slane %v495, 0
      %v515 = vunpack.c.l.b16 %v479
      %v516 = vunpack.c.l.b16 %v480
      %v517 = vunpack.c.l.b16 %v481
      %v518 = vunpack.c.l.b16 %v482
      %v519 = vunpack.c.l.b16 %v483
      %v520 = vunpack.c.l.b16 %v484
      %v521 = vunpack.c.l.b16 %v485
      %v522 = vunpack.c.l.b16 %v486
      %v523 = vunpack.c.l.b16 %v487
      %v524 = vunpack.c.l.b16 %v488
      %v525 = vunpack.c.l.b16 %v489
      %v526 = vunpack.c.l.b16 %v490
      %v527 = vunpack.c.l.b16 %v491
      %v528 = vunpack.c.l.b16 %v492
      %v529 = vunpack.c.l.b16 %v493
      %v530 = vunpack.c.l.b16 %v494
      %v531 = vpack.c.b16 %v516, %v515
      %v532 = vpack.c.b16 %v518, %v517
      %v533 = vpack.c.b16 %v520, %v519
      %v534 = vpack.c.b16 %v522, %v521
      %v535 = vpack.c.b16 %v524, %v523
      %v536 = vpack.c.b16 %v526, %v525
      %v537 = vpack.c.b16 %v528, %v527
      %v538 = vpack.c.b16 %v530, %v529
      %547 = vmatpush.bf16.msra.mxu0 %v538
      %548 = vmatpush.bf16.msra.mxu0 %v537
      %549 = vmatpush.bf16.msra.mxu0 %v536
      %550 = vmatpush.bf16.msra.mxu0 %v535
      %551 = vmatpush.bf16.msra.mxu0 %v534
      %552 = vmatpush.bf16.msra.mxu0 %v533
      %553 = vmatpush.bf16.msra.mxu0 %v532
      %554 = vmatpush.bf16.msra.mxu0 %v531
      %555 = vmatmul.bf16.gmra.mxu0 %v471
      %v556 = vpop.f32.mrf.mxu0
      %v557 = vadd.f32 %v497, %v556
      %v558 = vpop.f32.mrf.mxu0
      %v559 = vadd.f32 %v497, %v558
      %560 = vmatmul.bf16.gmra.mxu0 %v472
      %v561 = vpop.f32.mrf.mxu0
      %v562 = vadd.f32 %v497, %v561
      %v563 = vpop.f32.mrf.mxu0
      %v564 = vadd.f32 %v497, %v563
      %565 = vmatmul.bf16.gmra.mxu0 %v473
      %v566 = vpop.f32.mrf.mxu0
      %v567 = vadd.f32 %v497, %v566
      %v568 = vpop.f32.mrf.mxu0
      %v569 = vadd.f32 %v497, %v568
      %570 = vmatmul.bf16.gmra.mxu0 %v474
      %v571 = vpop.f32.mrf.mxu0
      %v572 = vadd.f32 %v497, %v571
      %v573 = vpop.f32.mrf.mxu0
      %v574 = vadd.f32 %v497, %v573
      %575 = vmatmul.bf16.gmra.mxu0 %v475
      %v576 = vpop.f32.mrf.mxu0
      %v577 = vadd.f32 %v497, %v576
      %v578 = vpop.f32.mrf.mxu0
      %v579 = vadd.f32 %v497, %v578
      %580 = vmatmul.bf16.gmra.mxu0 %v476
      %v581 = vpop.f32.mrf.mxu0
      %v582 = vadd.f32 %v497, %v581
      %v583 = vpop.f32.mrf.mxu0
      %v584 = vadd.f32 %v497, %v583
      %585 = vmatmul.bf16.gmra.mxu0 %v477
      %v586 = vpop.f32.mrf.mxu0
      %v587 = vadd.f32 %v497, %v586
      %v588 = vpop.f32.mrf.mxu0
      %v589 = vadd.f32 %v497, %v588
      %590 = vmatmul.bf16.gmra.mxu0 %v478
      %v591 = vpop.f32.mrf.mxu0
      %v592 = vadd.f32 %v497, %v591
      %v593 = vpop.f32.mrf.mxu0
      %v594 = vadd.f32 %v497, %v593
      %595 = vdwg.mxu0
      %v596 = vmax.f32 %v557, 0.0
      %v597 = vmax.f32 %v559, 0.0
      %v598 = vmax.f32 %v562, 0.0
      %v599 = vmax.f32 %v564, 0.0
      %v600 = vmax.f32 %v567, 0.0
      %v601 = vmax.f32 %v569, 0.0
      %v602 = vmax.f32 %v572, 0.0
      %v603 = vmax.f32 %v574, 0.0
      %v604 = vmax.f32 %v577, 0.0
      %v605 = vmax.f32 %v579, 0.0
      %v606 = vmax.f32 %v582, 0.0
      %v607 = vmax.f32 %v584, 0.0
      %v608 = vmax.f32 %v587, 0.0
      %v609 = vmax.f32 %v589, 0.0
      %v610 = vmax.f32 %v592, 0.0
      %v611 = vmax.f32 %v594, 0.0
      %v612 = vpack.c.bf16 %v597, %v596
      %v613 = vpack.c.bf16 %v599, %v598
      %v614 = vpack.c.bf16 %v601, %v600
      %v615 = vpack.c.bf16 %v603, %v602
      %v616 = vpack.c.bf16 %v605, %v604
      %v617 = vpack.c.bf16 %v607, %v606
      %v618 = vpack.c.bf16 %v609, %v608
      %v619 = vpack.c.bf16 %v611, %v610
      %v620 = vld [vmem:[%s5] sm:$0xf]
      %v621 = vld [vmem:[%s5 + $0x4] sm:$0xf]
      %v622 = vld [vmem:[%s5 + $0x8] sm:$0xf]
      %v623 = vld [vmem:[%s5 + $0xc] sm:$0xf]
      %v624 = vld [vmem:[%s5 + $0x10] sm:$0xf]
      %v625 = vld [vmem:[%s5 + $0x14] sm:$0xf]
      %v626 = vld [vmem:[%s5 + $0x18] sm:$0xf]
      %v627 = vld [vmem:[%s5 + $0x1c] sm:$0xf]
      %v628 = vld [vmem:[%s5 + $0x20] sm:$0xf]
      %v629 = vld [vmem:[%s5 + $0x24] sm:$0xf]
      %v630 = vld [vmem:[%s5 + $0x28] sm:$0xf]
      %v631 = vld [vmem:[%s5 + $0x2c] sm:$0xf]
      %v632 = vld [vmem:[%s5 + $0x30] sm:$0xf]
      %v633 = vld [vmem:[%s5 + $0x34] sm:$0xf]
      %v634 = vld [vmem:[%s5 + $0x38] sm:$0xf]
      %v635 = vld [vmem:[%s5 + $0x3c] sm:$0xf]
      %v636 = vld [vmem:[%s6] sm:$0x1]
      %v638 = vperm.slane %v636, 0
      %v656 = vunpack.c.l.b16 %v620
      %v657 = vunpack.c.l.b16 %v621
      %v658 = vunpack.c.l.b16 %v622
      %v659 = vunpack.c.l.b16 %v623
      %v660 = vunpack.c.l.b16 %v624
      %v661 = vunpack.c.l.b16 %v625
      %v662 = vunpack.c.l.b16 %v626
      %v663 = vunpack.c.l.b16 %v627
      %v664 = vunpack.c.l.b16 %v628
      %v665 = vunpack.c.l.b16 %v629
      %v666 = vunpack.c.l.b16 %v630
      %v667 = vunpack.c.l.b16 %v631
      %v668 = vunpack.c.l.b16 %v632
      %v669 = vunpack.c.l.b16 %v633
      %v670 = vunpack.c.l.b16 %v634
      %v671 = vunpack.c.l.b16 %v635
      %v672 = vpack.c.b16 %v657, %v656
      %v673 = vpack.c.b16 %v659, %v658
      %v674 = vpack.c.b16 %v661, %v660
      %v675 = vpack.c.b16 %v663, %v662
      %v676 = vpack.c.b16 %v665, %v664
      %v677 = vpack.c.b16 %v667, %v666
      %v678 = vpack.c.b16 %v669, %v668
      %v679 = vpack.c.b16 %v671, %v670
      %688 = vmatpush.bf16.msra.mxu0 %v679
      %689 = vmatpush.bf16.msra.mxu0 %v678
      %690 = vmatpush.bf16.msra.mxu0 %v677
      %691 = vmatpush.bf16.msra.mxu0 %v676
      %692 = vmatpush.bf16.msra.mxu0 %v675
      %693 = vmatpush.bf16.msra.mxu0 %v674
      %694 = vmatpush.bf16.msra.mxu0 %v673
      %695 = vmatpush.bf16.msra.mxu0 %v672
      %696 = vmatmul.bf16.gmra.mxu0 %v612
      %v697 = vpop.f32.mrf.mxu0
      %v698 = vadd.f32 %v638, %v697
      %v699 = vpop.f32.mrf.mxu0
      %v700 = vadd.f32 %v638, %v699
      %701 = vmatmul.bf16.gmra.mxu0 %v613
      %v702 = vpop.f32.mrf.mxu0
      %v703 = vadd.f32 %v638, %v702
      %v704 = vpop.f32.mrf.mxu0
      %v705 = vadd.f32 %v638, %v704
      %706 = vmatmul.bf16.gmra.mxu0 %v614
      %v707 = vpop.f32.mrf.mxu0
      %v708 = vadd.f32 %v638, %v707
      %v709 = vpop.f32.mrf.mxu0
      %v710 = vadd.f32 %v638, %v709
      %711 = vmatmul.bf16.gmra.mxu0 %v615
      %v712 = vpop.f32.mrf.mxu0
      %v713 = vadd.f32 %v638, %v712
      %v714 = vpop.f32.mrf.mxu0
      %v715 = vadd.f32 %v638, %v714
      %716 = vmatmul.bf16.gmra.mxu0 %v616
      %v717 = vpop.f32.mrf.mxu0
      %v718 = vadd.f32 %v638, %v717
      %v719 = vpop.f32.mrf.mxu0
      %v720 = vadd.f32 %v638, %v719
      %721 = vmatmul.bf16.gmra.mxu0 %v617
      %v722 = vpop.f32.mrf.mxu0
      %v723 = vadd.f32 %v638, %v722
      %v724 = vpop.f32.mrf.mxu0
      %v725 = vadd.f32 %v638, %v724
      %726 = vmatmul.bf16.gmra.mxu0 %v618
      %v727 = vpop.f32.mrf.mxu0
      %v728 = vadd.f32 %v638, %v727
      %v729 = vpop.f32.mrf.mxu0
      %v730 = vadd.f32 %v638, %v729
      %731 = vmatmul.bf16.gmra.mxu0 %v619
      %v732 = vpop.f32.mrf.mxu0
      %v733 = vadd.f32 %v638, %v732
      %v734 = vpop.f32.mrf.mxu0
      %v735 = vadd.f32 %v638, %v734
      %736 = vdwg.mxu0
      %v737 = vmax.f32 %v698, 0.0
      %v738 = vmax.f32 %v700, 0.0
      %v739 = vmax.f32 %v703, 0.0
      %v740 = vmax.f32 %v705, 0.0
      %v741 = vmax.f32 %v708, 0.0
      %v742 = vmax.f32 %v710, 0.0
      %v743 = vmax.f32 %v713, 0.0
      %v744 = vmax.f32 %v715, 0.0
      %v745 = vmax.f32 %v718, 0.0
      %v746 = vmax.f32 %v720, 0.0
      %v747 = vmax.f32 %v723, 0.0
      %v748 = vmax.f32 %v725, 0.0
      %v749 = vmax.f32 %v728, 0.0
      %v750 = vmax.f32 %v730, 0.0
      %v751 = vmax.f32 %v733, 0.0
      %v752 = vmax.f32 %v735, 0.0
      %v753 = vpack.c.bf16 %v738, %v737
      %v754 = vpack.c.bf16 %v740, %v739
      %v755 = vpack.c.bf16 %v742, %v741
      %v756 = vpack.c.bf16 %v744, %v743
      %v757 = vpack.c.bf16 %v746, %v745
      %v758 = vpack.c.bf16 %v748, %v747
      %v759 = vpack.c.bf16 %v750, %v749
      %v760 = vpack.c.bf16 %v752, %v751
      %v761 = vld [vmem:[%s7] sm:$0xf]
      %v762 = vld [vmem:[%s7 + $0x4] sm:$0xf]
      %v763 = vld [vmem:[%s7 + $0x8] sm:$0xf]
      %v764 = vld [vmem:[%s7 + $0xc] sm:$0xf]
      %v765 = vld [vmem:[%s7 + $0x10] sm:$0xf]
      %v766 = vld [vmem:[%s7 + $0x14] sm:$0xf]
      %v767 = vld [vmem:[%s7 + $0x18] sm:$0xf]
      %v768 = vld [vmem:[%s7 + $0x1c] sm:$0xf]
      %v769 = vld [vmem:[%s7 + $0x20] sm:$0xf]
      %v770 = vld [vmem:[%s7 + $0x24] sm:$0xf]
      %v771 = vld [vmem:[%s7 + $0x28] sm:$0xf]
      %v772 = vld [vmem:[%s7 + $0x2c] sm:$0xf]
      %v773 = vld [vmem:[%s7 + $0x30] sm:$0xf]
      %v774 = vld [vmem:[%s7 + $0x34] sm:$0xf]
      %v775 = vld [vmem:[%s7 + $0x38] sm:$0xf]
      %v776 = vld [vmem:[%s7 + $0x3c] sm:$0xf]
      %v777 = vld [vmem:[%s8] sm:$0x1]
      %v779 = vperm.slane %v777, 0
      %v797 = vunpack.c.l.b16 %v761
      %v798 = vunpack.c.l.b16 %v762
      %v799 = vunpack.c.l.b16 %v763
      %v800 = vunpack.c.l.b16 %v764
      %v801 = vunpack.c.l.b16 %v765
      %v802 = vunpack.c.l.b16 %v766
      %v803 = vunpack.c.l.b16 %v767
      %v804 = vunpack.c.l.b16 %v768
      %v805 = vunpack.c.l.b16 %v769
      %v806 = vunpack.c.l.b16 %v770
      %v807 = vunpack.c.l.b16 %v771
      %v808 = vunpack.c.l.b16 %v772
      %v809 = vunpack.c.l.b16 %v773
      %v810 = vunpack.c.l.b16 %v774
      %v811 = vunpack.c.l.b16 %v775
      %v812 = vunpack.c.l.b16 %v776
      %v813 = vpack.c.b16 %v798, %v797
      %v814 = vpack.c.b16 %v800, %v799
      %v815 = vpack.c.b16 %v802, %v801
      %v816 = vpack.c.b16 %v804, %v803
      %v817 = vpack.c.b16 %v806, %v805
      %v818 = vpack.c.b16 %v808, %v807
      %v819 = vpack.c.b16 %v810, %v809
      %v820 = vpack.c.b16 %v812, %v811
      %829 = vmatpush.bf16.msra.mxu0 %v820
      %830 = vmatpush.bf16.msra.mxu0 %v819
      %831 = vmatpush.bf16.msra.mxu0 %v818
      %832 = vmatpush.bf16.msra.mxu0 %v817
      %833 = vmatpush.bf16.msra.mxu0 %v816
      %834 = vmatpush.bf16.msra.mxu0 %v815
      %835 = vmatpush.bf16.msra.mxu0 %v814
      %836 = vmatpush.bf16.msra.mxu0 %v813
      %837 = vmatmul.bf16.gmra.mxu0 %v753
      %v838 = vpop.f32.mrf.mxu0
      %v839 = vadd.f32 %v779, %v838
      %v840 = vpop.f32.mrf.mxu0
      %v841 = vadd.f32 %v779, %v840
      %842 = vmatmul.bf16.gmra.mxu0 %v754
      %v843 = vpop.f32.mrf.mxu0
      %v844 = vadd.f32 %v779, %v843
      %v845 = vpop.f32.mrf.mxu0
      %v846 = vadd.f32 %v779, %v845
      %847 = vmatmul.bf16.gmra.mxu0 %v755
      %v848 = vpop.f32.mrf.mxu0
      %v849 = vadd.f32 %v779, %v848
      %v850 = vpop.f32.mrf.mxu0
      %v851 = vadd.f32 %v779, %v850
      %852 = vmatmul.bf16.gmra.mxu0 %v756
      %v853 = vpop.f32.mrf.mxu0
      %v854 = vadd.f32 %v779, %v853
      %v855 = vpop.f32.mrf.mxu0
      %v856 = vadd.f32 %v779, %v855
      %857 = vmatmul.bf16.gmra.mxu0 %v757
      %v858 = vpop.f32.mrf.mxu0
      %v859 = vadd.f32 %v779, %v858
      %v860 = vpop.f32.mrf.mxu0
      %v861 = vadd.f32 %v779, %v860
      %862 = vmatmul.bf16.gmra.mxu0 %v758
      %v863 = vpop.f32.mrf.mxu0
      %v864 = vadd.f32 %v779, %v863
      %v865 = vpop.f32.mrf.mxu0
      %v866 = vadd.f32 %v779, %v865
      %867 = vmatmul.bf16.gmra.mxu0 %v759
      %v868 = vpop.f32.mrf.mxu0
      %v869 = vadd.f32 %v779, %v868
      %v870 = vpop.f32.mrf.mxu0
      %v871 = vadd.f32 %v779, %v870
      %872 = vmatmul.bf16.gmra.mxu0 %v760
      %v873 = vpop.f32.mrf.mxu0
      %v874 = vadd.f32 %v779, %v873
      %v875 = vpop.f32.mrf.mxu0
      %v876 = vadd.f32 %v779, %v875
      %877 = vdwg.mxu0
      %878 = vst [vmem:[%s334] sm:$0xff] %v839
      %879 = vst [vmem:[%s334 + $0x8] sm:$0xff] %v841
      %880 = vst [vmem:[%s334 + $0x10] sm:$0xff] %v844
      %881 = vst [vmem:[%s334 + $0x18] sm:$0xff] %v846
      %882 = vst [vmem:[%s334 + $0x20] sm:$0xff] %v849
      %883 = vst [vmem:[%s334 + $0x28] sm:$0xff] %v851
      %884 = vst [vmem:[%s334 + $0x30] sm:$0xff] %v854
      %885 = vst [vmem:[%s334 + $0x38] sm:$0xff] %v856
      %886 = vst [vmem:[%s334 + $0x40] sm:$0xff] %v859
      %887 = vst [vmem:[%s334 + $0x48] sm:$0xff] %v861
      %888 = vst [vmem:[%s334 + $0x50] sm:$0xff] %v864
      %889 = vst [vmem:[%s334 + $0x58] sm:$0xff] %v866
      %890 = vst [vmem:[%s334 + $0x60] sm:$0xff] %v869
      %891 = vst [vmem:[%s334 + $0x68] sm:$0xff] %v871
      %892 = vst [vmem:[%s334 + $0x70] sm:$0xff] %v874
      %893 = vst [vmem:[%s334 + $0x78] sm:$0xff] %v876
      %s894 = smul.u32 16, %s20
      %p895 = scmp.lt.s32.totalorder %s894, 31
      %s896 = scalar_select %p895, %s894, 31
      %s897 = smul.addr %s896, 8
      %s898 = scalar_lea.vmem %s9, %s897
      // Predicated region
      $region57: #{vanilla_mlp_forward.1} parent=55 // pred_check
        %p899 = pneg %p232
      $region58: #{vanilla_mlp_forward.1} parent=55 // pred_check_branch
        %901 = sbr.rel (%p899) target = $region60
      $region59: #{vanilla_mlp_forward.1} parent=55 // pred_region
        %s902 = smul.u32 16, %s20
      $region60: #{vanilla_mlp_forward.1} parent=55 // pred_fallthru
        _
    $region56: #{vanilla_mlp_forward.1} parent=5 // pred_fallthru
      _
    %p903 = scmp.le.s32.totalorder 2, %s15
    // Predicated region
    $region61: #{vanilla_mlp_forward.1} parent=5 // pred_check
      %p904 = pneg %p903
    $region62: #{vanilla_mlp_forward.1} parent=5 // pred_check_branch
      %906 = sbr.rel (%p904) target = $region64
    $region63: #{vanilla_mlp_forward.1} parent=5 // pred_region
      %s907 = ssub.s32 %s15, 2
      // Predicated region
      $region65: #{vanilla_mlp_forward.1} parent=63 // pred_check
        %p908 = pneg %p238
      $region66: #{vanilla_mlp_forward.1} parent=63 // pred_check_branch
        %910 = sbr.rel (%p908) target = $region68
      $region67: #{vanilla_mlp_forward.1} parent=63 // pred_region
        %s911 = smul.u32 16, %s21
        %p912 = scmp.lt.s32.totalorder %s911, 31
        %s913 = scalar_select %p912, %s911, 31
        %s914 = smul.addr %s913, 8
        %s915 = scalar_lea.vmem %s9, %s914
      $region68: #{vanilla_mlp_forward.1} parent=63 // pred_fallthru
        _
    $region64: #{vanilla_mlp_forward.1} parent=5 // pred_fallthru
      _
  $region6: #{vanilla_mlp_forward.1} parent=0 // loop_footer
    %s19 = sadd.s32 1, %s15
  $region7: #{vanilla_mlp_forward.1} parent=0 // loop_footer_branch
    %14 = sbr.rel target = $region3
  $region8: #{vanilla_mlp_forward.1} parent=0 // loop_exit
    _

</llo_original>
